<compile_context>
chip_gen: v5e
topology: v5e:2x2
jax: 0.10.0
libtpu: 0.0.40
codegen_flags: <defaults>
</compile_context>

<pallas_src>
import functools

import jax
import jax.numpy as jnp
from jax.experimental import pallas as pl
from jax.experimental.pallas import tpu as pltpu


def _round_up(x, m):
    return ((x + m - 1) // m) * m


def _vmem_capacity_bytes():
    """Per-generation VMEM capacity (v5e/v6e: 128 MiB, v7x: 64 MiB per TC)."""
    try:
        return int(pltpu.get_tpu_info().vmem_capacity_bytes)
    except Exception:
        return 64 << 20  # conservative fallback (v7x per-TensorCore VMEM)


def _pick_tiles(n, d, itemsize, max_tile_m, max_tile_n):
    """Choose (TM, TN, vmem_limit_bytes) from the per-generation VMEM budget."""
    budget = (_vmem_capacity_bytes() * 3) // 4  # ~48 MiB on v7x, ~96 MiB v5e/v6e
    tm = min(_round_up(max_tile_m, 16), _round_up(n, 16))

    def tile_bytes(tn):
        return (2 * tm * d * itemsize        # double-buffered A row block
                + 2 * tn * d * itemsize      # double-buffered B column block
                + 6 * tm * tn * 4            # f32 logits + exp/select temporaries
                + 2 * (tm + tn) * 4          # double-buffered output blocks
                + 2 * tm * 4                 # online-LSE scratch
                + (1 << 20))                 # slack

    tn_cap = max(128, min(_round_up(max_tile_n, 128), _round_up(n, 128)))
    tn = 128
    for cand in range(tn_cap, 127, -128):
        if tile_bytes(cand) <= budget:
            tn = cand
            break
    return tm, tn, int(min(budget, 96 << 20))


def _clip_lse_kernel(scale_ref, a_ref, b_ref, row_out_ref, colp_out_ref,
                     m_scr, l_scr, *, tm, tn, n_valid, mask_rows, mask_cols):
    """One (row-tile i, column-tile j) step.

    Computes the (TM, TN) logits tile ONCE and uses it for both directions:
      * row direction  (A rows vs. all B): online LSE accumulated in scratch,
        finalized on the last column tile,
      * column direction (B rows vs. all A): per-tile partial LSE written to a
        lane-dense (1, TN) output block, merged in the wrapper.
    """
    i = pl.program_id(0)
    j = pl.program_id(1)
    nj = pl.num_programs(1)

    @pl.when(j == 0)
    def _init():
        m_scr[...] = jnp.full(m_scr.shape, -1e30, jnp.float32)
        l_scr[...] = jnp.zeros(l_scr.shape, jnp.float32)

    # Contract the feature dim of both operands directly on the MXU (no
    # transpose); accumulate in f32 regardless of the input dtype.
    logits = jax.lax.dot_general(
        a_ref[...], b_ref[...],
        dimension_numbers=(((1,), (1,)), ((), ())),
        preferred_element_type=jnp.float32,
    )
    # Scale the f32 logits once (not the narrow-dtype A operand, not per-j):
    # no bf16 rounding of scale*a and no repeated VPU/vst work on the A tile.
    logits = logits * scale_ref[0, 0]

    # Mask padded rows / columns (statically skipped when N divides the tiles).
    if mask_rows or mask_cols:
        valid = None
        if mask_cols:
            col_ids = j * tn + jax.lax.broadcasted_iota(jnp.int32, (tm, tn), 1)
            valid = col_ids < n_valid
        if mask_rows:
            row_ids = i * tm + jax.lax.broadcasted_iota(jnp.int32, (tm, tn), 0)
            rmask = row_ids < n_valid
            valid = rmask if valid is None else jnp.logical_and(valid, rmask)
        logits = jnp.where(valid, logits, jnp.float32(-1e30))

    # --- Direction 1 (rows of A vs. all of B): flash-style online LSE over
    # column tiles; lane-axis (axis=-1) reductions, all state in f32.
    m_prev = m_scr[...]
    m_new = jnp.maximum(m_prev, jnp.max(logits, axis=-1, keepdims=True))
    l_scr[...] = jnp.exp(m_prev - m_new) * l_scr[...] + jnp.sum(
        jnp.exp(logits - m_new), axis=-1, keepdims=True)
    m_scr[...] = m_new

    # --- Direction 2 (rows of B vs. all of A): per-(row-tile, column) partial
    # LSE.  Keeping this a per-step output (instead of cross-row-tile scratch)
    # keeps grid axis 0 safe to run as "parallel" on dual-TC chips (v7x), and
    # the output block is lane-dense (1, TN).
    pmax = jnp.max(logits, axis=0, keepdims=True)                   # (1, TN)
    psum = jnp.sum(jnp.exp(logits - pmax), axis=0, keepdims=True)   # (1, TN)
    colp_out_ref[...] = pmax + jnp.log(psum)

    @pl.when(j == nj - 1)
    def _finalize_rows():
        # TODO(synk): could also be emitted lane-dense as (1, TM); it is only
        # written once per row tile so the masked-store cost is negligible.
        row_out_ref[...] = m_scr[...] + jnp.log(l_scr[...])


@functools.partial(jax.jit,
                   static_argnames=("compute_dtype", "max_tile_m", "max_tile_n"))
def clip_loss(wsi_features, rna_features, logit_scale, *,
              compute_dtype=None, max_tile_m=256, max_tile_n=4096):
    """Pallas equivalent of ClipLoss.forward(...) with output_dict=False.

    compute_dtype: optional dtype (e.g. jnp.bfloat16) for the MXU operands;
    the matmul accumulates in f32 and all softmax/LSE math stays f32.
    """
    n, d = wsi_features.shape
    assert rna_features.shape == (n, d)

    scale = jnp.asarray(logit_scale, jnp.float32)
    scale_11 = scale.reshape(1, 1)

    a = wsi_features if compute_dtype is None else wsi_features.astype(compute_dtype)
    b = rna_features if compute_dtype is None else rna_features.astype(compute_dtype)

    itemsize = jnp.dtype(a.dtype).itemsize
    tm, tn, vmem_limit = _pick_tiles(n, d, itemsize, max_tile_m, max_tile_n)

    # Pad the row operand to a multiple of TM and the column operand to a
    # multiple of TN (independently); padded entries are masked in-kernel.
    n_pad_m = _round_up(n, tm)
    n_pad_n = _round_up(n, tn)
    if n_pad_m != n:
        a = jnp.pad(a, ((0, n_pad_m - n), (0, 0)))
    if n_pad_n != n:
        b = jnp.pad(b, ((0, n_pad_n - n), (0, 0)))
    ni, nj = n_pad_m // tm, n_pad_n // tn

    kernel = functools.partial(
        _clip_lse_kernel, tm=tm, tn=tn, n_valid=n,
        mask_rows=(n_pad_m != n), mask_cols=(n_pad_n != n))

    row_lse, col_partial = pl.pallas_call(
        kernel,
        out_shape=(
            jax.ShapeDtypeStruct((n_pad_m, 1), jnp.float32),
            jax.ShapeDtypeStruct((1, ni * n_pad_n), jnp.float32),
        ),
        grid_spec=pltpu.PrefetchScalarGridSpec(
            num_scalar_prefetch=0,
            grid=(ni, nj),
            in_specs=[
                # logit_scale: (1, 1) f32 scalar in SMEM.
                pl.BlockSpec((1, 1), lambda i, j: (0, 0),
                             memory_space=pltpu.MemorySpace.SMEM),
                # Row tile of A: constant over j, stays resident in VMEM.
                pl.BlockSpec((tm, d), lambda i, j: (i, 0)),
                # Wide column tile of B: streamed along the reduction axis.
                pl.BlockSpec((tn, d), lambda i, j: (j, 0)),
            ],
            out_specs=(
                # Per-row LSE of direction 1 (accumulated over j).
                pl.BlockSpec((tm, 1), lambda i, j: (i, 0)),
                # Lane-dense per-(row-tile, column-tile) partial LSE of dir. 2.
                pl.BlockSpec((1, tn), lambda i, j: (0, i * nj + j)),
            ),
            scratch_shapes=[
                pltpu.VMEM((tm, 1), jnp.float32),   # running max
                pltpu.VMEM((tm, 1), jnp.float32),   # running sum-exp
            ],
        ),
        compiler_params=pltpu.CompilerParams(
            # Row tiles are fully independent -> dual-TC split on v7x; column
            # tiles carry the online-LSE state -> "arbitrary".
            dimension_semantics=("parallel", "arbitrary"),
            vmem_limit_bytes=vmem_limit,
        ),
    )(scale_11, a, b)

    lse_img = row_lse[:n, 0]                                       # image->text
    col_partial = col_partial.reshape(ni, n_pad_n)[:, :n]
    lse_txt = jax.scipy.special.logsumexp(col_partial, axis=0)     # text->image

    # Shared diagonal logit, hoisted to a trivial O(N*D) f32 op in the wrapper.
    diag = scale * jnp.sum(
        wsi_features.astype(jnp.float32) * rna_features.astype(jnp.float32),
        axis=-1)

    # 0.5 * (mean(lse_img - diag) + mean(lse_txt - diag))
    return (jnp.sum(lse_img) + jnp.sum(lse_txt) - 2.0 * jnp.sum(diag)) * (0.5 / n)


def _reference_clip_loss(wsi, rna, scale):
    """Pure-JAX reference mirroring torch F.cross_entropy semantics."""
    logits_i = scale * (wsi.astype(jnp.float32) @ rna.astype(jnp.float32).T)
    logits_t = logits_i.T  # == scale * rna @ wsi.T
    n = logits_i.shape[0]
    idx = jnp.arange(n)

    def ce(logits):
        lse = jax.scipy.special.logsumexp(logits, axis=1)
        return jnp.mean(lse - logits[idx, idx])

    return 0.5 * (ce(logits_i) + ce(logits_t))


if __name__ == "__main__":
    key = jax.random.PRNGKey(0)
    k1, k2 = jax.random.split(key)

    # Small shapes consistent with the module: batch N=256, feature dim D=32.
    N, D = 256, 32
    wsi = jax.random.normal(k1, (N, D), dtype=jnp.float32)
    rna = jax.random.normal(k2, (N, D), dtype=jnp.float32)
    # L2-normalize like typical CLIP usage (demo only; the module itself does not).
    wsi = wsi / jnp.linalg.norm(wsi, axis=-1, keepdims=True)
    rna = rna / jnp.linalg.norm(rna, axis=-1, keepdims=True)
    logit_scale = jnp.float32(1.0 / 0.07)

    ref = _reference_clip_loss(wsi, rna, logit_scale)

    # Multi-tile grid (4 row tiles x 2 column tiles): exercises the fused
    # online-LSE + column-partial-merge path.
    loss = clip_loss(wsi, rna, logit_scale, max_tile_m=64, max_tile_n=128)
    jax.block_until_ready(loss)
    assert jnp.allclose(loss, ref, atol=2e-3, rtol=2e-3), (loss, ref)

    # Default config (wide tiles, single block at this tiny size).
    loss_def = clip_loss(wsi, rna, logit_scale)
    jax.block_until_ready(loss_def)
    assert jnp.allclose(loss_def, ref, atol=2e-3, rtol=2e-3), (loss_def, ref)

    # bf16 MXU operands (halved HBM traffic), f32 accumulation / softmax state.
    loss_bf16 = clip_loss(wsi, rna, logit_scale, compute_dtype=jnp.bfloat16,
                          max_tile_m=64, max_tile_n=128)
    jax.block_until_ready(loss_bf16)
    assert jnp.allclose(loss_bf16, ref, atol=1e-1, rtol=1e-1), (loss_bf16, ref)

    # Ragged batch size (no aligned divisor): pad + in-kernel masking path.
    Nr = 200
    loss_r = clip_loss(wsi[:Nr], rna[:Nr], logit_scale,
                       max_tile_m=64, max_tile_n=128)
    jax.block_until_ready(loss_r)
    ref_r = _reference_clip_loss(wsi[:Nr], rna[:Nr], logit_scale)
    assert jnp.allclose(loss_r, ref_r, atol=2e-3, rtol=2e-3), (loss_r, ref_r)

    print("KERNEL_OK")
</pallas_src>

<mosaic_0001>
module attributes {stable_mosaic.version = 11 : i64} {
  func.func @_clip_lse_kernel(%arg0: i32, %arg1: i32, %arg2: memref<1x1xf32, #tpu.memory_space<smem>>, %arg3: memref<64x32xf32, #tpu.memory_space<vmem>>, %arg4: memref<128x32xf32, #tpu.memory_space<vmem>>, %arg5: memref<64x1xf32, #tpu.memory_space<vmem>>, %arg6: memref<1x128xf32, #tpu.memory_space<vmem>>, %arg7: memref<64x1xf32, #tpu.memory_space<vmem>>, %arg8: memref<64x1xf32, #tpu.memory_space<vmem>>) attributes {dimension_semantics = [#tpu.dimension_semantics<parallel>, #tpu.dimension_semantics<arbitrary>], iteration_bounds = array<i64: 4, 2>, scalar_prefetch = 0 : i64, scratch_operands = 2 : i64, tpu.core_type = #tpu.core_type<tc>, window_params = [{transform_indices = @transform_0, window_bounds = array<i64: 1, 1>}, {transform_indices = @transform_1, window_bounds = array<i64: 64, 32>}, {transform_indices = @transform_2, window_bounds = array<i64: 128, 32>}, {transform_indices = @transform_3, window_bounds = array<i64: 64, 1>}, {transform_indices = @transform_4, window_bounds = array<i64: 1, 128>}]} {
    %c0_i32 = arith.constant 0 : i32
    %0 = arith.cmpi eq, %arg1, %c0_i32 : i32
    %1 = arith.extui %0 : i1 to i32
    %c0_i32_0 = arith.constant 0 : i32
    %2 = arith.cmpi ne, %1, %c0_i32_0 : i32
    scf.if %2 {
      %cst_21 = arith.constant -1.000000e+30 : f32
      %38 = vector.broadcast %cst_21 : f32 to vector<64x1xf32>
      %c0_22 = arith.constant 0 : index
      %c0_23 = arith.constant 0 : index
      %39 = vector.load %arg7[%c0_22, %c0_23] : memref<64x1xf32, #tpu.memory_space<vmem>>, vector<64x1xf32>
      tpu.vector_store %arg7[%c0_22, %c0_23], %38 {strides = array<i32>} : memref<64x1xf32, #tpu.memory_space<vmem>>, vector<64x1xf32>,
      %cst_24 = arith.constant 0.000000e+00 : f32
      %40 = vector.broadcast %cst_24 : f32 to vector<64x1xf32>
      %c0_25 = arith.constant 0 : index
      %c0_26 = arith.constant 0 : index
      %41 = vector.load %arg8[%c0_25, %c0_26] : memref<64x1xf32, #tpu.memory_space<vmem>>, vector<64x1xf32>
      tpu.vector_store %arg8[%c0_25, %c0_26], %40 {strides = array<i32>} : memref<64x1xf32, #tpu.memory_space<vmem>>, vector<64x1xf32>,
    } else {
    }
    %c0 = arith.constant 0 : index
    %c0_1 = arith.constant 0 : index
    %3 = vector.load %arg3[%c0, %c0_1] : memref<64x32xf32, #tpu.memory_space<vmem>>, vector<64x32xf32>
    %c0_2 = arith.constant 0 : index
    %c0_3 = arith.constant 0 : index
    %4 = vector.load %arg4[%c0_2, %c0_3] : memref<128x32xf32, #tpu.memory_space<vmem>>, vector<128x32xf32>
    %cst = arith.constant dense<0.000000e+00> : vector<64x128xf32>
    %5 = tpu.matmul %3, %4, %cst {dimension_numbers = #tpu.dot_dimension_numbers<[1], [1], [0], [0], [0, 0, 1, 0], [], []>} : vector<64x32xf32>, vector<128x32xf32>, vector<64x128xf32> -> vector<64x128xf32>
    %c0_4 = arith.constant 0 : index
    %c0_5 = arith.constant 0 : index
    %6 = memref.load %arg2[%c0_4, %c0_5] : memref<1x1xf32, #tpu.memory_space<smem>>
    %7 = vector.broadcast %6 : f32 to vector<64x128xf32>
    %8 = arith.mulf %5, %7 : vector<64x128xf32>
    %c0_6 = arith.constant 0 : index
    %c0_7 = arith.constant 0 : index
    %9 = vector.load %arg7[%c0_6, %c0_7] : memref<64x1xf32, #tpu.memory_space<vmem>>, vector<64x1xf32>
    %cst_8 = arith.constant dense<0xFF800000> : vector<64xf32>
    %10 = vector.multi_reduction <maximumf>, %8, %cst_8 [1] : vector<64x128xf32> to vector<64xf32>
    %11 = vector.shape_cast %10 : vector<64xf32> to vector<64x1xf32>
    %12 = arith.maximumf %9, %11 : vector<64x1xf32>
    %13 = arith.subf %9, %12 : vector<64x1xf32>
    %14 = math.exp %13 : vector<64x1xf32>
    %c0_9 = arith.constant 0 : index
    %c0_10 = arith.constant 0 : index
    %15 = vector.load %arg8[%c0_9, %c0_10] : memref<64x1xf32, #tpu.memory_space<vmem>>, vector<64x1xf32>
    %16 = arith.mulf %14, %15 : vector<64x1xf32>
    %17 = vector.broadcast %12 : vector<64x1xf32> to vector<64x128xf32>
    %18 = arith.subf %8, %17 : vector<64x128xf32>
    %19 = math.exp %18 : vector<64x128xf32>
    %cst_11 = arith.constant dense<0.000000e+00> : vector<64xf32>
    %20 = vector.multi_reduction <add>, %19, %cst_11 [1] : vector<64x128xf32> to vector<64xf32>
    %21 = vector.shape_cast %20 : vector<64xf32> to vector<64x1xf32>
    %22 = arith.addf %16, %21 : vector<64x1xf32>
    %c0_12 = arith.constant 0 : index
    %c0_13 = arith.constant 0 : index
    %23 = vector.load %arg8[%c0_12, %c0_13] : memref<64x1xf32, #tpu.memory_space<vmem>>, vector<64x1xf32>
    tpu.vector_store %arg8[%c0_12, %c0_13], %22 {strides = array<i32>} : memref<64x1xf32, #tpu.memory_space<vmem>>, vector<64x1xf32>,
    %c0_14 = arith.constant 0 : index
    %c0_15 = arith.constant 0 : index
    %24 = vector.load %arg7[%c0_14, %c0_15] : memref<64x1xf32, #tpu.memory_space<vmem>>, vector<64x1xf32>
    tpu.vector_store %arg7[%c0_14, %c0_15], %12 {strides = array<i32>} : memref<64x1xf32, #tpu.memory_space<vmem>>, vector<64x1xf32>,
    %cst_16 = arith.constant dense<0xFF800000> : vector<128xf32>
    %25 = vector.multi_reduction <maximumf>, %8, %cst_16 [0] : vector<64x128xf32> to vector<128xf32>
    %26 = vector.shape_cast %25 : vector<128xf32> to vector<1x128xf32>
    %27 = vector.broadcast %26 : vector<1x128xf32> to vector<64x128xf32>
    %28 = arith.subf %8, %27 : vector<64x128xf32>
    %29 = math.exp %28 : vector<64x128xf32>
    %cst_17 = arith.constant dense<0.000000e+00> : vector<128xf32>
    %30 = vector.multi_reduction <add>, %29, %cst_17 [0] : vector<64x128xf32> to vector<128xf32>
    %31 = vector.shape_cast %30 : vector<128xf32> to vector<1x128xf32>
    %32 = math.log %31 : vector<1x128xf32>
    %33 = arith.addf %26, %32 : vector<1x128xf32>
    %c0_18 = arith.constant 0 : index
    %c0_19 = arith.constant 0 : index
    %34 = vector.load %arg6[%c0_18, %c0_19] : memref<1x128xf32, #tpu.memory_space<vmem>>, vector<1x128xf32>
    tpu.vector_store %arg6[%c0_18, %c0_19], %33 {strides = array<i32>} : memref<1x128xf32, #tpu.memory_space<vmem>>, vector<1x128xf32>,
    %c1_i32 = arith.constant 1 : i32
    %35 = arith.cmpi eq, %arg1, %c1_i32 : i32
    %36 = arith.extui %35 : i1 to i32
    %c0_i32_20 = arith.constant 0 : i32
    %37 = arith.cmpi ne, %36, %c0_i32_20 : i32
    scf.if %37 {
      %c0_21 = arith.constant 0 : index
      %c0_22 = arith.constant 0 : index
      %38 = vector.load %arg7[%c0_21, %c0_22] : memref<64x1xf32, #tpu.memory_space<vmem>>, vector<64x1xf32>
      %c0_23 = arith.constant 0 : index
      %c0_24 = arith.constant 0 : index
      %39 = vector.load %arg8[%c0_23, %c0_24] : memref<64x1xf32, #tpu.memory_space<vmem>>, vector<64x1xf32>
      %40 = math.log %39 : vector<64x1xf32>
      %41 = arith.addf %38, %40 : vector<64x1xf32>
      %c0_25 = arith.constant 0 : index
      %c0_26 = arith.constant 0 : index
      %42 = vector.load %arg5[%c0_25, %c0_26] : memref<64x1xf32, #tpu.memory_space<vmem>>, vector<64x1xf32>
      tpu.vector_store %arg5[%c0_25, %c0_26], %41 {strides = array<i32>} : memref<64x1xf32, #tpu.memory_space<vmem>>, vector<64x1xf32>,
    } else {
    }
    return
  }
  func.func @transform_0(%arg0: i32, %arg1: i32) -> (i32, i32) {
    %c0_i32 = arith.constant 0 : i32
    %c0_i32_0 = arith.constant 0 : i32
    %c0_i32_1 = arith.constant 0 : i32
    return %c0_i32, %c0_i32_0 : i32, i32
  }
  func.func @transform_1(%arg0: i32, %arg1: i32) -> (i32, i32) {
    %c0_i32 = arith.constant 0 : i32
    %c0_i32_0 = arith.constant 0 : i32
    return %arg0, %c0_i32 : i32, i32
  }
  func.func @transform_2(%arg0: i32, %arg1: i32) -> (i32, i32) {
    %c0_i32 = arith.constant 0 : i32
    %c0_i32_0 = arith.constant 0 : i32
    return %arg1, %c0_i32 : i32, i32
  }
  func.func @transform_3(%arg0: i32, %arg1: i32) -> (i32, i32) {
    %c0_i32 = arith.constant 0 : i32
    %c0_i32_0 = arith.constant 0 : i32
    return %arg0, %c0_i32 : i32, i32
  }
  func.func @transform_4(%arg0: i32, %arg1: i32) -> (i32, i32) {
    %c2_i32 = arith.constant 2 : i32
    %0 = arith.muli %arg0, %c2_i32 : i32
    %1 = arith.addi %0, %arg1 : i32
    %c0_i32 = arith.constant 0 : i32
    %c0_i32_0 = arith.constant 0 : i32
    return %c0_i32, %1 : i32, i32
  }
}

</mosaic_0001>

<llo_original>
// kernel: clip_loss.1
$region0: #{clip_loss.1}
  #allocation0 [shape = 'u32[]', space=smem, size = 0x4, offset = 0x4, fixed_abs, tag = 'smem constant byte address 0x4 - core index']
  #allocation1 [shape = 'u32[72,128]{1,0:T(1,128)}', space=vmem, size = 0x9000, scoped, tag = 'internal scratch']
  #allocation2 [shape = 'f32[64,1]{1,0:T(8,128)}', space=vmem, size = 0x8000, scoped, tag = 'scratch operand']
  #allocation3 [shape = 'f32[64,1]{1,0:T(8,128)}', space=vmem, size = 0x8000, scoped, tag = 'scratch operand']
  #allocation4 [shape = 'f32[1,1]{1,0:T(1,128)S(6)}', space=smem, size = 0x200, scoped, tag = 'scoped memory for clip_loss.1']
  %s0 = inlined_call_operand.<no memory space> [shape: f32[1,1], index: 0, kind: input, shape index: {}]
  %s1 = inlined_call_operand.vmem [shape: f32[256,32], index: 1, kind: input, shape index: {}]
  %s2 = inlined_call_operand.vmem [shape: f32[256,32], index: 2, kind: input, shape index: {}]
  %s3 = inlined_call_operand.vmem [shape: f32[256,1], index: 3, kind: output, shape index: {0}]
  %s4 = inlined_call_operand.vmem [shape: f32[1,1024], index: 4, kind: output, shape index: {1}]
  %5 = xla_tuple %s3, %s4
  %s6 = sld [smem:[#allocation0]]
  $region61: #{clip_loss.1} parent=0
    _
  %s8 = ssub.s32 1, %s6
  %s9 = scalar_select 0, %s8, %s6
  %10 = sst [smem:[#allocation4]] %s0
  loop: start=0, step=1, limit=10
  $region2: #{clip_loss.1} parent=0 // loop_pre_header
    _
  $region3: #{clip_loss.1} parent=0 // loop_header
    %s12 = sphi 0, %s16
    %p13 = scmp.ge.s32.totalorder %s12, 10
    %s19 = sphi 0, %s31
    %s20 = sphi 0, %s27
    %s21 = sphi 0, %s19
    %s22 = sphi 0, %s20
    %s23 = sphi 0, %s21
    %s24 = sphi 0, %s22
    %s32 = sphi 0, %s32
    %s34 = sphi 0, %s32
    %s35 = sphi 0, %s34
    %s49 = sphi 0, %s35
    %s55 = sphi 0, %s57
    %s58 = sphi 0, %s55
    %s59 = sphi 0, %s58
    %s75 = sphi 0, %s59
    %s81 = sphi 0, %s83
    %s84 = sphi 0, %s81
    %s85 = sphi 0, %s84
    %s101 = sphi 0, %s85
    %s107 = sphi 0, %s109
    %s110 = sphi 0, %s107
    %s111 = sphi 0, %s110
    %s127 = sphi 0, %s111
    %s137 = sphi 0, %s139
    %s140 = sphi 0, %s137
    %s141 = sphi 0, %s140
    %s157 = sphi 0, %s141
  $region4: #{clip_loss.1} parent=0 // loop_header_branch
    %15 = sbr.rel (%p13) target = $region8
  $region5: #{clip_loss.1} parent=0 // loop_body
    %s17 = ssub.s32 %s12, 1
    %s18 = ssub.s32 %s12, 2
    %s25 = sadd.s32 1, %s20
    %p26 = scmp.ge.s32.totalorder %s25, 2
    %s27 = scalar_select %p26, 0, %s25
    %s28 = sadd.s32 1, %s19
    %s29 = scalar_select %p26, %s28, %s19
    %p30 = scmp.ge.s32.totalorder %s29, 4
    %s31 = scalar_select %p30, 0, %s29
    %s33 = sadd.s32 %s32, 1
    %p36 = scmp.eq.s32.totalorder %s12, 7
    %p37 = scmp.ne.s32.totalorder %s32, %s34
    %p38 = scmp.eq.s32.totalorder %s12, 0
    %p39 = por %p37, %p38
    %p40 = scmp.ne.s32.totalorder %s32, %s34
    %p41 = scmp.eq.s32.totalorder %s17, 7
    %p42 = por %p40, %p41
    %p43 = scmp.ne.s32.totalorder %s34, %s35
    %p44 = scmp.eq.s32.totalorder %s17, 0
    %p45 = por %p43, %p44
    %p46 = scmp.ne.s32.totalorder %s34, %s35
    %p47 = scmp.eq.s32.totalorder %s18, 7
    %p48 = por %p46, %p47
    %p50 = scmp.ne.s32.totalorder %s35, %s49
    %p51 = scmp.eq.s32.totalorder %s18, 0
    %p52 = por %p50, %p51
    %s53 = ssub.s32 %s19, %s31
    %p54 = scmp.eq.s32.totalorder %s53, 0
    %s56 = sadd.s32 %s55, 1
    %s57 = scalar_select %p54, %s55, %s56
    %p60 = pneg %p54
    %p61 = scmp.eq.s32.totalorder %s12, 7
    %p62 = por %p60, %p61
    %p63 = scmp.ne.s32.totalorder %s55, %s58
    %p64 = scmp.eq.s32.totalorder %s12, 0
    %p65 = por %p63, %p64
    %p66 = scmp.ne.s32.totalorder %s55, %s58
    %p67 = scmp.eq.s32.totalorder %s17, 7
    %p68 = por %p66, %p67
    %p69 = scmp.ne.s32.totalorder %s58, %s59
    %p70 = scmp.eq.s32.totalorder %s17, 0
    %p71 = por %p69, %p70
    %p72 = scmp.ne.s32.totalorder %s58, %s59
    %p73 = scmp.eq.s32.totalorder %s18, 7
    %p74 = por %p72, %p73
    %p76 = scmp.ne.s32.totalorder %s59, %s75
    %p77 = scmp.eq.s32.totalorder %s18, 0
    %p78 = por %p76, %p77
    %s79 = ssub.s32 %s20, %s27
    %p80 = scmp.eq.s32.totalorder %s79, 0
    %s82 = sadd.s32 %s81, 1
    %s83 = scalar_select %p80, %s81, %s82
    %p86 = pneg %p80
    %p87 = scmp.eq.s32.totalorder %s12, 7
    %p88 = por %p86, %p87
    %p89 = scmp.ne.s32.totalorder %s81, %s84
    %p90 = scmp.eq.s32.totalorder %s12, 0
    %p91 = por %p89, %p90
    %p92 = scmp.ne.s32.totalorder %s81, %s84
    %p93 = scmp.eq.s32.totalorder %s17, 7
    %p94 = por %p92, %p93
    %p95 = scmp.ne.s32.totalorder %s84, %s85
    %p96 = scmp.eq.s32.totalorder %s17, 0
    %p97 = por %p95, %p96
    %p98 = scmp.ne.s32.totalorder %s84, %s85
    %p99 = scmp.eq.s32.totalorder %s18, 7
    %p100 = por %p98, %p99
    %p102 = scmp.ne.s32.totalorder %s85, %s101
    %p103 = scmp.eq.s32.totalorder %s18, 0
    %p104 = por %p102, %p103
    %s105 = ssub.s32 %s19, %s31
    %p106 = scmp.eq.s32.totalorder %s105, 0
    %s108 = sadd.s32 %s107, 1
    %s109 = scalar_select %p106, %s107, %s108
    %p112 = pneg %p106
    %p113 = scmp.eq.s32.totalorder %s12, 7
    %p114 = por %p112, %p113
    %p115 = scmp.ne.s32.totalorder %s107, %s110
    %p116 = scmp.eq.s32.totalorder %s12, 0
    %p117 = por %p115, %p116
    %p118 = scmp.ne.s32.totalorder %s107, %s110
    %p119 = scmp.eq.s32.totalorder %s17, 7
    %p120 = por %p118, %p119
    %p121 = scmp.ne.s32.totalorder %s110, %s111
    %p122 = scmp.eq.s32.totalorder %s17, 0
    %p123 = por %p121, %p122
    %p124 = scmp.ne.s32.totalorder %s110, %s111
    %p125 = scmp.eq.s32.totalorder %s18, 7
    %p126 = por %p124, %p125
    %p128 = scmp.ne.s32.totalorder %s111, %s127
    %p129 = scmp.eq.s32.totalorder %s18, 0
    %p130 = por %p128, %p129
    %s131 = smul.u32 %s19, 2
    %s132 = sadd.s32 %s131, %s20
    %s133 = smul.u32 %s31, 2
    %s134 = sadd.s32 %s133, %s27
    %s135 = ssub.s32 %s132, %s134
    %p136 = scmp.eq.s32.totalorder %s135, 0
    %s138 = sadd.s32 %s137, 1
    %s139 = scalar_select %p136, %s137, %s138
    %p142 = pneg %p136
    %p143 = scmp.eq.s32.totalorder %s12, 7
    %p144 = por %p142, %p143
    %p145 = scmp.ne.s32.totalorder %s137, %s140
    %p146 = scmp.eq.s32.totalorder %s12, 0
    %p147 = por %p145, %p146
    %p148 = scmp.ne.s32.totalorder %s137, %s140
    %p149 = scmp.eq.s32.totalorder %s17, 7
    %p150 = por %p148, %p149
    %p151 = scmp.ne.s32.totalorder %s140, %s141
    %p152 = scmp.eq.s32.totalorder %s17, 0
    %p153 = por %p151, %p152
    %p154 = scmp.ne.s32.totalorder %s140, %s141
    %p155 = scmp.eq.s32.totalorder %s18, 7
    %p156 = por %p154, %p155
    %p158 = scmp.ne.s32.totalorder %s141, %s157
    %p159 = scmp.eq.s32.totalorder %s18, 0
    %p160 = por %p158, %p159
    %p161 = scmp.le.s32.totalorder 1, %s12
    %p162 = scmp.lt.s32.totalorder %s12, 9
    %p163 = pnand %p161, %p162
    %p164 = pneg %p163
    // Predicated region
    $region9: #{clip_loss.1} parent=5 // pred_check
      _
    $region10: #{clip_loss.1} parent=5 // pred_check_branch
      %166 = sbr.rel (%p163) target = $region12
    $region11: #{clip_loss.1} parent=5 // pred_region
      %s167 = ssub.s32 %s12, 1
      // Predicated region
      $region13: #{clip_loss.1} parent=11 // pred_check
        %p168 = pneg %p45
      $region14: #{clip_loss.1} parent=11 // pred_check_branch
        %170 = sbr.rel (%p168) target = $region16
      $region15: #{clip_loss.1} parent=11 // pred_region
        _
      $region16: #{clip_loss.1} parent=11 // pred_fallthru
        _
    $region12: #{clip_loss.1} parent=5 // pred_fallthru
      _
    %p171 = scmp.lt.s32.totalorder %s12, 8
    // Predicated region
    $region17: #{clip_loss.1} parent=5 // pred_check
      %p172 = pneg %p171
    $region18: #{clip_loss.1} parent=5 // pred_check_branch
      %174 = sbr.rel (%p172) target = $region20
    $region19: #{clip_loss.1} parent=5 // pred_region
      // Predicated region
      $region21: #{clip_loss.1} parent=19 // pred_check
        %p175 = pneg %p65
      $region22: #{clip_loss.1} parent=19 // pred_check_branch
        %177 = sbr.rel (%p175) target = $region24
      $region23: #{clip_loss.1} parent=19 // pred_region
        %s178 = smul.u32 8, %s19
        %p179 = scmp.lt.s32.totalorder %s178, 31
        %s180 = scalar_select %p179, %s178, 31
        %s181 = smul.addr %s180, 8
        %s182 = scalar_lea.vmem %s1, %s181
        %s183 = smul.u32 8, %s19
      $region24: #{clip_loss.1} parent=19 // pred_fallthru
        _
      // Predicated region
      $region25: #{clip_loss.1} parent=19 // pred_check
        %p184 = pneg %p91
      $region26: #{clip_loss.1} parent=19 // pred_check_branch
        %186 = sbr.rel (%p184) target = $region28
      $region27: #{clip_loss.1} parent=19 // pred_region
        %s187 = smul.u32 16, %s20
        %p188 = scmp.lt.s32.totalorder %s187, 31
        %s189 = scalar_select %p188, %s187, 31
        %s190 = smul.addr %s189, 8
        %s191 = scalar_lea.vmem %s2, %s190
        %s192 = smul.u32 16, %s20
      $region28: #{clip_loss.1} parent=19 // pred_fallthru
        _
    $region20: #{clip_loss.1} parent=5 // pred_fallthru
      _
    %p193 = scmp.le.s32.totalorder 1, %s12
    %p194 = scmp.lt.s32.totalorder %s12, 9
    %p195 = pnand %p193, %p194
    %p196 = pneg %p195
    // Predicated region
    $region29: #{clip_loss.1} parent=5 // pred_check
      _
    $region30: #{clip_loss.1} parent=5 // pred_check_branch
      %198 = sbr.rel (%p195) target = $region32
    $region31: #{clip_loss.1} parent=5 // pred_region
      %s199 = ssub.s32 %s12, 1
      %p200 = pneg %p45
      %p201 = pneg %p42
      %s202 = smul.u32 8, %s21
      %p203 = scmp.lt.s32.totalorder %s202, 31
      %s204 = scalar_select %p203, %s202, 31
      %s205 = smul.addr %s204, 8
      %s206 = scalar_lea.vmem %s1, %s205
      %p207 = pneg %p71
      %p208 = pneg %p68
      %s209 = smul.u32 16, %s22
      %p210 = scmp.lt.s32.totalorder %s209, 31
      %s211 = scalar_select %p210, %s209, 31
      %s212 = smul.addr %s211, 8
      %s213 = scalar_lea.vmem %s2, %s212
      %p214 = pneg %p97
      %p215 = pneg %p94
      %p216 = pneg %p123
      %p217 = pneg %p120
      %s218 = smul.u32 8, %s21
      %p219 = scmp.lt.s32.totalorder %s218, 31
      %s220 = scalar_select %p219, %s218, 31
      %s221 = smul.addr %s220, 8
      %s222 = scalar_lea.vmem %s3, %s221
      %p223 = pneg %p153
      %p224 = pneg %p150
      %s225 = smul.u32 %s21, 2
      %s226 = sadd.s32 %s225, %s22
      %p227 = scmp.lt.s32.totalorder %s226, 7
      %s228 = scalar_select %p227, %s226, 7
      %s229 = scalar_lea.vmem %s4, %s228
      %s230 = smul.u32 8, %s21
      %p231 = scmp.lt.s32.totalorder %s230, 31
      %s232 = scalar_select %p231, %s230, 31
      %s233 = smul.addr %s232, 8
      %s234 = scalar_lea.vmem %s1, %s233
      %s235 = smul.u32 8, %s21
      %s236 = smul.u32 16, %s22
      %p237 = scmp.lt.s32.totalorder %s236, 31
      %s238 = scalar_select %p237, %s236, 31
      %s239 = smul.addr %s238, 8
      %s240 = scalar_lea.vmem %s2, %s239
      %s241 = smul.u32 16, %s22
      %s242 = smul.u32 8, %s21
      %p243 = scmp.lt.s32.totalorder %s242, 31
      %s244 = scalar_select %p243, %s242, 31
      %s245 = smul.addr %s244, 8
      %s246 = scalar_lea.vmem %s3, %s245
      %s247 = smul.u32 8, %s21
      %s248 = smul.u32 %s21, 2
      %s249 = sadd.s32 %s248, %s22
      %p250 = scmp.lt.s32.totalorder %s249, 7
      %s251 = scalar_select %p250, %s249, 7
      %s252 = scalar_lea.vmem %s4, %s251
      %s253 = smul.u32 %s21, 2
      %s254 = sadd.s32 %s253, %s22
      %p255 = scmp.eq.s32.totalorder %s22, 0
      // Predicated region
      $region33: #{clip_loss.1} parent=31 // pred_check
        %p256 = pneg %p255
      $region34: #{clip_loss.1} parent=31 // pred_check_branch
        %258 = sbr.rel (%p256) target = $region36
      $region35: #{clip_loss.1} parent=31 // pred_region
        %vm259 = vcmask 7168
        %260 = vst.msk [vmem:[#allocation2] sm:$0xff] %vm259, -1e+30
        %261 = vst.msk [vmem:[#allocation2 + $0x8] sm:$0xff] %vm259, -1e+30
        %262 = vst.msk [vmem:[#allocation2 + $0x10] sm:$0xff] %vm259, -1e+30
        %263 = vst.msk [vmem:[#allocation2 + $0x18] sm:$0xff] %vm259, -1e+30
        %264 = vst.msk [vmem:[#allocation2 + $0x20] sm:$0xff] %vm259, -1e+30
        %265 = vst.msk [vmem:[#allocation2 + $0x28] sm:$0xff] %vm259, -1e+30
        %266 = vst.msk [vmem:[#allocation2 + $0x30] sm:$0xff] %vm259, -1e+30
        %267 = vst.msk [vmem:[#allocation2 + $0x38] sm:$0xff] %vm259, -1e+30
        %268 = vst.msk [vmem:[#allocation3] sm:$0xff] %vm259, 0.0
        %269 = vst.msk [vmem:[#allocation3 + $0x8] sm:$0xff] %vm259, 0.0
        %270 = vst.msk [vmem:[#allocation3 + $0x10] sm:$0xff] %vm259, 0.0
        %271 = vst.msk [vmem:[#allocation3 + $0x18] sm:$0xff] %vm259, 0.0
        %272 = vst.msk [vmem:[#allocation3 + $0x20] sm:$0xff] %vm259, 0.0
        %273 = vst.msk [vmem:[#allocation3 + $0x28] sm:$0xff] %vm259, 0.0
        %274 = vst.msk [vmem:[#allocation3 + $0x30] sm:$0xff] %vm259, 0.0
        %275 = vst.msk [vmem:[#allocation3 + $0x38] sm:$0xff] %vm259, 0.0
      $region36: #{clip_loss.1} parent=31 // pred_fallthru
        _
      %v276 = vld [vmem:[%s234] sm:$0xff]
      %v277 = vld [vmem:[%s234 + $0x8] sm:$0xff]
      %v278 = vld [vmem:[%s234 + $0x10] sm:$0xff]
      %v279 = vld [vmem:[%s234 + $0x18] sm:$0xff]
      %v280 = vld [vmem:[%s234 + $0x20] sm:$0xff]
      %v281 = vld [vmem:[%s234 + $0x28] sm:$0xff]
      %v282 = vld [vmem:[%s234 + $0x30] sm:$0xff]
      %v283 = vld [vmem:[%s234 + $0x38] sm:$0xff]
      %v284 = vld [vmem:[%s240] sm:$0xff]
      %v285 = vld [vmem:[%s240 + $0x8] sm:$0xff]
      %v286 = vld [vmem:[%s240 + $0x10] sm:$0xff]
      %v287 = vld [vmem:[%s240 + $0x18] sm:$0xff]
      %v288 = vld [vmem:[%s240 + $0x20] sm:$0xff]
      %v289 = vld [vmem:[%s240 + $0x28] sm:$0xff]
      %v290 = vld [vmem:[%s240 + $0x30] sm:$0xff]
      %v291 = vld [vmem:[%s240 + $0x38] sm:$0xff]
      %v292 = vld [vmem:[%s240 + $0x40] sm:$0xff]
      %v293 = vld [vmem:[%s240 + $0x48] sm:$0xff]
      %v294 = vld [vmem:[%s240 + $0x50] sm:$0xff]
      %v295 = vld [vmem:[%s240 + $0x58] sm:$0xff]
      %v296 = vld [vmem:[%s240 + $0x60] sm:$0xff]
      %v297 = vld [vmem:[%s240 + $0x68] sm:$0xff]
      %v298 = vld [vmem:[%s240 + $0x70] sm:$0xff]
      %v299 = vld [vmem:[%s240 + $0x78] sm:$0xff]
      %vm300 = vcmask 261120
      %v302 = vsel %vm300, %v276, 0
      %v305 = vsel %vm300, %v277, 0
      %v308 = vsel %vm300, %v278, 0
      %v311 = vsel %vm300, %v279, 0
      %v314 = vsel %vm300, %v280, 0
      %v317 = vsel %vm300, %v281, 0
      %v320 = vsel %vm300, %v282, 0
      %v323 = vsel %vm300, %v283, 0
      %v326 = vsel %vm300, %v284, 0
      %v329 = vsel %vm300, %v285, 0
      %v332 = vsel %vm300, %v286, 0
      %v335 = vsel %vm300, %v287, 0
      %v338 = vsel %vm300, %v288, 0
      %v341 = vsel %vm300, %v289, 0
      %v344 = vsel %vm300, %v290, 0
      %v347 = vsel %vm300, %v291, 0
      %v350 = vsel %vm300, %v292, 0
      %v353 = vsel %vm300, %v293, 0
      %v356 = vsel %vm300, %v294, 0
      %v359 = vsel %vm300, %v295, 0
      %v362 = vsel %vm300, %v296, 0
      %v365 = vsel %vm300, %v297, 0
      %v368 = vsel %vm300, %v298, 0
      %v371 = vsel %vm300, %v299, 0
      %373 = vmatpush.xpose.msra.mxu0 %v371
      %374 = vmatpush.xpose.msra.mxu0 %v368
      %375 = vmatpush.xpose.msra.mxu0 %v365
      %376 = vmatpush.xpose.msra.mxu0 %v362
      %377 = vmatpush.xpose.msra.mxu0 %v359
      %378 = vmatpush.xpose.msra.mxu0 %v356
      %379 = vmatpush.xpose.msra.mxu0 %v353
      %380 = vmatpush.xpose.msra.mxu0 %v350
      %381 = vmatpush.xpose.msra.mxu0 %v347
      %382 = vmatpush.xpose.msra.mxu0 %v344
      %383 = vmatpush.xpose.msra.mxu0 %v341
      %384 = vmatpush.xpose.msra.mxu0 %v338
      %385 = vmatpush.xpose.msra.mxu0 %v335
      %386 = vmatpush.xpose.msra.mxu0 %v332
      %387 = vmatpush.xpose.msra.mxu0 %v329
      %388 = vmatpush.xpose.msra.mxu0 %v326
      %389 = vmatmul.f32.gmra.mxu0 %v302
      %v390 = vpop.f32.mrf.mxu0
      %v391 = vadd.f32 0.0, %v390
      %392 = vmatmul.f32.gmra.mxu0 %v305
      %v393 = vpop.f32.mrf.mxu0
      %v394 = vadd.f32 0.0, %v393
      %395 = vmatmul.f32.gmra.mxu0 %v308
      %v396 = vpop.f32.mrf.mxu0
      %v397 = vadd.f32 0.0, %v396
      %398 = vmatmul.f32.gmra.mxu0 %v311
      %v399 = vpop.f32.mrf.mxu0
      %v400 = vadd.f32 0.0, %v399
      %401 = vmatmul.f32.gmra.mxu0 %v314
      %v402 = vpop.f32.mrf.mxu0
      %v403 = vadd.f32 0.0, %v402
      %404 = vmatmul.f32.gmra.mxu0 %v317
      %v405 = vpop.f32.mrf.mxu0
      %v406 = vadd.f32 0.0, %v405
      %407 = vmatmul.f32.gmra.mxu0 %v320
      %v408 = vpop.f32.mrf.mxu0
      %v409 = vadd.f32 0.0, %v408
      %410 = vmatmul.f32.gmra.mxu0 %v323
      %v411 = vpop.f32.mrf.mxu0
      %v412 = vadd.f32 0.0, %v411
      %413 = vdwg.mxu0
      %s414 = sld [smem:[#allocation4]]
      %v415 = vstv %s414
      %v416 = vmul.f32 %v391, %v415
      %v417 = vmul.f32 %v394, %v415
      %v418 = vmul.f32 %v397, %v415
      %v419 = vmul.f32 %v400, %v415
      %v420 = vmul.f32 %v403, %v415
      %v421 = vmul.f32 %v406, %v415
      %v422 = vmul.f32 %v409, %v415
      %v423 = vmul.f32 %v412, %v415
      %v424 = vld [vmem:[#allocation2] sm:$0xff]
      %v425 = vld [vmem:[#allocation2 + $0x8] sm:$0xff]
      %v426 = vld [vmem:[#allocation2 + $0x10] sm:$0xff]
      %v427 = vld [vmem:[#allocation2 + $0x18] sm:$0xff]
      %v428 = vld [vmem:[#allocation2 + $0x20] sm:$0xff]
      %v429 = vld [vmem:[#allocation2 + $0x28] sm:$0xff]
      %v430 = vld [vmem:[#allocation2 + $0x30] sm:$0xff]
      %v431 = vld [vmem:[#allocation2 + $0x38] sm:$0xff]
      %432 = vmax.xlane.f32.xlu0 %v416
      %v433 = vpop.xlane.xlu0 %432
      %434 = vmax.xlane.f32.xlu0 %v417
      %v435 = vpop.xlane.xlu0 %434
      %436 = vmax.xlane.f32.xlu0 %v418
      %v437 = vpop.xlane.xlu0 %436
      %438 = vmax.xlane.f32.xlu0 %v419
      %v439 = vpop.xlane.xlu0 %438
      %440 = vmax.xlane.f32.xlu0 %v420
      %v441 = vpop.xlane.xlu0 %440
      %442 = vmax.xlane.f32.xlu0 %v421
      %v443 = vpop.xlane.xlu0 %442
      %444 = vmax.xlane.f32.xlu0 %v422
      %v445 = vpop.xlane.xlu0 %444
      %446 = vmax.xlane.f32.xlu0 %v423
      %v447 = vpop.xlane.xlu0 %446
      %v448 = vmax.f32 %v424, %v433
      %v449 = vmax.f32 %v425, %v435
      %v450 = vmax.f32 %v426, %v437
      %v451 = vmax.f32 %v427, %v439
      %v452 = vmax.f32 %v428, %v441
      %v453 = vmax.f32 %v429, %v443
      %v454 = vmax.f32 %v430, %v445
      %v455 = vmax.f32 %v431, %v447
      %v456 = vsub.f32 %v424, %v448
      %v457 = vsub.f32 %v425, %v449
      %v458 = vsub.f32 %v426, %v450
      %v459 = vsub.f32 %v427, %v451
      %v460 = vsub.f32 %v428, %v452
      %v461 = vsub.f32 %v429, %v453
      %v462 = vsub.f32 %v430, %v454
      %v463 = vsub.f32 %v431, %v455
      %v464 = vmul.f32 %v456, 1.442695
      %v465 = vpow.pop %v464
      %v466 = vmul.f32 %v457, 1.442695
      %v467 = vpow.pop %v466
      %v468 = vmul.f32 %v458, 1.442695
      %v469 = vpow.pop %v468
      %v470 = vmul.f32 %v459, 1.442695
      %v471 = vpow.pop %v470
      %v472 = vmul.f32 %v460, 1.442695
      %v473 = vpow.pop %v472
      %v474 = vmul.f32 %v461, 1.442695
      %v475 = vpow.pop %v474
      %v476 = vmul.f32 %v462, 1.442695
      %v477 = vpow.pop %v476
      %v478 = vmul.f32 %v463, 1.442695
      %v479 = vpow.pop %v478
      %v480 = vld [vmem:[#allocation3] sm:$0xff]
      %v481 = vld [vmem:[#allocation3 + $0x8] sm:$0xff]
      %v482 = vld [vmem:[#allocation3 + $0x10] sm:$0xff]
      %v483 = vld [vmem:[#allocation3 + $0x18] sm:$0xff]
      %v484 = vld [vmem:[#allocation3 + $0x20] sm:$0xff]
      %v485 = vld [vmem:[#allocation3 + $0x28] sm:$0xff]
      %v486 = vld [vmem:[#allocation3 + $0x30] sm:$0xff]
      %v487 = vld [vmem:[#allocation3 + $0x38] sm:$0xff]
      %v488 = vmul.f32 %v465, %v480
      %v489 = vmul.f32 %v467, %v481
      %v490 = vmul.f32 %v469, %v482
      %v491 = vmul.f32 %v471, %v483
      %v492 = vmul.f32 %v473, %v484
      %v493 = vmul.f32 %v475, %v485
      %v494 = vmul.f32 %v477, %v486
      %v495 = vmul.f32 %v479, %v487
      %497 = vset.pattern.permute.xlu0 0
      %498 = vperm.xlu0 %497, %v448
      %v499 = vpop.permute.xlu0 %498
      %502 = vset.pattern.permute.xlu0 0
      %503 = vperm.xlu0 %502, %v449
      %v504 = vpop.permute.xlu0 %503
      %507 = vset.pattern.permute.xlu0 0
      %508 = vperm.xlu0 %507, %v450
      %v509 = vpop.permute.xlu0 %508
      %512 = vset.pattern.permute.xlu0 0
      %513 = vperm.xlu0 %512, %v451
      %v514 = vpop.permute.xlu0 %513
      %517 = vset.pattern.permute.xlu0 0
      %518 = vperm.xlu0 %517, %v452
      %v519 = vpop.permute.xlu0 %518
      %522 = vset.pattern.permute.xlu0 0
      %523 = vperm.xlu0 %522, %v453
      %v524 = vpop.permute.xlu0 %523
      %527 = vset.pattern.permute.xlu0 0
      %528 = vperm.xlu0 %527, %v454
      %v529 = vpop.permute.xlu0 %528
      %532 = vset.pattern.permute.xlu0 0
      %533 = vperm.xlu0 %532, %v455
      %v534 = vpop.permute.xlu0 %533
      %v536 = vsub.f32 %v416, %v499
      %v537 = vsub.f32 %v417, %v504
      %v538 = vsub.f32 %v418, %v509
      %v539 = vsub.f32 %v419, %v514
      %v540 = vsub.f32 %v420, %v519
      %v541 = vsub.f32 %v421, %v524
      %v542 = vsub.f32 %v422, %v529
      %v543 = vsub.f32 %v423, %v534
      %v544 = vmul.f32 %v536, 1.442695
      %v545 = vpow.pop %v544
      %v546 = vmul.f32 %v537, 1.442695
      %v547 = vpow.pop %v546
      %v548 = vmul.f32 %v538, 1.442695
      %v549 = vpow.pop %v548
      %v550 = vmul.f32 %v539, 1.442695
      %v551 = vpow.pop %v550
      %v552 = vmul.f32 %v540, 1.442695
      %v553 = vpow.pop %v552
      %v554 = vmul.f32 %v541, 1.442695
      %v555 = vpow.pop %v554
      %v556 = vmul.f32 %v542, 1.442695
      %v557 = vpow.pop %v556
      %v558 = vmul.f32 %v543, 1.442695
      %v559 = vpow.pop %v558
      %560 = vadd.xlane.f32.xlu0 %v545
      %v561 = vpop.xlane.xlu0 %560
      %562 = vadd.xlane.f32.xlu0 %v547
      %v563 = vpop.xlane.xlu0 %562
      %564 = vadd.xlane.f32.xlu0 %v549
      %v565 = vpop.xlane.xlu0 %564
      %566 = vadd.xlane.f32.xlu0 %v551
      %v567 = vpop.xlane.xlu0 %566
      %568 = vadd.xlane.f32.xlu0 %v553
      %v569 = vpop.xlane.xlu0 %568
      %570 = vadd.xlane.f32.xlu0 %v555
      %v571 = vpop.xlane.xlu0 %570
      %572 = vadd.xlane.f32.xlu0 %v557
      %v573 = vpop.xlane.xlu0 %572
      %574 = vadd.xlane.f32.xlu0 %v559
      %v575 = vpop.xlane.xlu0 %574
      %v576 = vadd.f32 %v488, %v561
      %v577 = vadd.f32 %v489, %v563
      %v578 = vadd.f32 %v490, %v565
      %v579 = vadd.f32 %v491, %v567
      %v580 = vadd.f32 %v492, %v569
      %v581 = vadd.f32 %v493, %v571
      %v582 = vadd.f32 %v494, %v573
      %v583 = vadd.f32 %v495, %v575
      %vm584 = vcmask 7168
      %585 = vst.msk [vmem:[#allocation3] sm:$0xff] %vm584, %v576
      %586 = vst.msk [vmem:[#allocation3 + $0x8] sm:$0xff] %vm584, %v577
      %587 = vst.msk [vmem:[#allocation3 + $0x10] sm:$0xff] %vm584, %v578
      %588 = vst.msk [vmem:[#allocation3 + $0x18] sm:$0xff] %vm584, %v579
      %589 = vst.msk [vmem:[#allocation3 + $0x20] sm:$0xff] %vm584, %v580
      %590 = vst.msk [vmem:[#allocation3 + $0x28] sm:$0xff] %vm584, %v581
      %591 = vst.msk [vmem:[#allocation3 + $0x30] sm:$0xff] %vm584, %v582
      %592 = vst.msk [vmem:[#allocation3 + $0x38] sm:$0xff] %vm584, %v583
      %593 = vst.msk [vmem:[#allocation2] sm:$0xff] %vm584, %v448
      %594 = vst.msk [vmem:[#allocation2 + $0x8] sm:$0xff] %vm584, %v449
      %595 = vst.msk [vmem:[#allocation2 + $0x10] sm:$0xff] %vm584, %v450
      %596 = vst.msk [vmem:[#allocation2 + $0x18] sm:$0xff] %vm584, %v451
      %597 = vst.msk [vmem:[#allocation2 + $0x20] sm:$0xff] %vm584, %v452
      %598 = vst.msk [vmem:[#allocation2 + $0x28] sm:$0xff] %vm584, %v453
      %599 = vst.msk [vmem:[#allocation2 + $0x30] sm:$0xff] %vm584, %v454
      %600 = vst.msk [vmem:[#allocation2 + $0x38] sm:$0xff] %vm584, %v455
      %v601 = vmax.f32 %v416, %v420
      %v602 = vmax.f32 %v417, %v421
      %v603 = vmax.f32 %v418, %v422
      %v604 = vmax.f32 %v419, %v423
      %v605 = vmax.f32 %v601, %v602
      %v606 = vmax.f32 %v603, %v604
      %v607 = vmax.f32 %v605, %v606
      %v608 = vrot.slane %v607, 4
      %v609 = vmax.f32 %v607, %v608
      %v610 = vrot.slane %v609, 2
      %v611 = vmax.f32 %v609, %v610
      %v612 = vrot.slane %v611, 1
      %v613 = vmax.f32 %v611, %v612
      %v614 = vsub.f32 %v416, %v613
      %v615 = vsub.f32 %v417, %v613
      %v616 = vsub.f32 %v418, %v613
      %v617 = vsub.f32 %v419, %v613
      %v618 = vsub.f32 %v420, %v613
      %v619 = vsub.f32 %v421, %v613
      %v620 = vsub.f32 %v422, %v613
      %v621 = vsub.f32 %v423, %v613
      %v622 = vmul.f32 %v614, 1.442695
      %v623 = vpow.pop %v622
      %v624 = vmul.f32 %v615, 1.442695
      %v625 = vpow.pop %v624
      %v626 = vmul.f32 %v616, 1.442695
      %v627 = vpow.pop %v626
      %v628 = vmul.f32 %v617, 1.442695
      %v629 = vpow.pop %v628
      %v630 = vmul.f32 %v618, 1.442695
      %v631 = vpow.pop %v630
      %v632 = vmul.f32 %v619, 1.442695
      %v633 = vpow.pop %v632
      %v634 = vmul.f32 %v620, 1.442695
      %v635 = vpow.pop %v634
      %v636 = vmul.f32 %v621, 1.442695
      %v637 = vpow.pop %v636
      %v638 = vadd.f32 %v623, %v625
      %v639 = vadd.f32 %v638, %v627
      %v640 = vadd.f32 %v639, %v629
      %v641 = vadd.f32 %v640, %v631
      %v642 = vadd.f32 %v641, %v633
      %v643 = vadd.f32 %v642, %v635
      %v644 = vadd.f32 %v643, %v637
      %v645 = vrot.slane %v644, 4
      %v646 = vadd.f32 %v644, %v645
      %v647 = vrot.slane %v646, 2
      %v648 = vadd.f32 %v646, %v647
      %v649 = vrot.slane %v648, 1
      %v650 = vadd.f32 %v648, %v649
      %v651 = vlog2.pop %v650
      %v652 = vmul.f32 %v651, 0.6931472
      %v653 = vadd.f32 %v613, %v652
      %654 = vst [vmem:[%s252] sm:$0x1] %v653
      %p655 = scmp.eq.s32.totalorder %s22, 1
      // Predicated region
      $region37: #{clip_loss.1} parent=31 // pred_check
        %p656 = pneg %p655
      $region38: #{clip_loss.1} parent=31 // pred_check_branch
        %658 = sbr.rel (%p656) target = $region40
      $region39: #{clip_loss.1} parent=31 // pred_region
        %v659 = vld [vmem:[#allocation2] sm:$0xff]
        %v660 = vld [vmem:[#allocation2 + $0x8] sm:$0xff]
        %v661 = vld [vmem:[#allocation2 + $0x10] sm:$0xff]
        %v662 = vld [vmem:[#allocation2 + $0x18] sm:$0xff]
        %v663 = vld [vmem:[#allocation2 + $0x20] sm:$0xff]
        %v664 = vld [vmem:[#allocation2 + $0x28] sm:$0xff]
        %v665 = vld [vmem:[#allocation2 + $0x30] sm:$0xff]
        %v666 = vld [vmem:[#allocation2 + $0x38] sm:$0xff]
        %v667 = vld [vmem:[#allocation3] sm:$0xff]
        %v668 = vld [vmem:[#allocation3 + $0x8] sm:$0xff]
        %v669 = vld [vmem:[#allocation3 + $0x10] sm:$0xff]
        %v670 = vld [vmem:[#allocation3 + $0x18] sm:$0xff]
        %v671 = vld [vmem:[#allocation3 + $0x20] sm:$0xff]
        %v672 = vld [vmem:[#allocation3 + $0x28] sm:$0xff]
        %v673 = vld [vmem:[#allocation3 + $0x30] sm:$0xff]
        %v674 = vld [vmem:[#allocation3 + $0x38] sm:$0xff]
        %v675 = vlog2.pop %v667
        %v676 = vmul.f32 %v675, 0.6931472
        %v677 = vlog2.pop %v668
        %v678 = vmul.f32 %v677, 0.6931472
        %v679 = vlog2.pop %v669
        %v680 = vmul.f32 %v679, 0.6931472
        %v681 = vlog2.pop %v670
        %v682 = vmul.f32 %v681, 0.6931472
        %v683 = vlog2.pop %v671
        %v684 = vmul.f32 %v683, 0.6931472
        %v685 = vlog2.pop %v672
        %v686 = vmul.f32 %v685, 0.6931472
        %v687 = vlog2.pop %v673
        %v688 = vmul.f32 %v687, 0.6931472
        %v689 = vlog2.pop %v674
        %v690 = vmul.f32 %v689, 0.6931472
        %v691 = vadd.f32 %v659, %v676
        %v692 = vadd.f32 %v660, %v678
        %v693 = vadd.f32 %v661, %v680
        %v694 = vadd.f32 %v662, %v682
        %v695 = vadd.f32 %v663, %v684
        %v696 = vadd.f32 %v664, %v686
        %v697 = vadd.f32 %v665, %v688
        %v698 = vadd.f32 %v666, %v690
        %699 = vst.msk [vmem:[%s246] sm:$0xff] %vm584, %v691
        %700 = vst.msk [vmem:[%s246 + $0x8] sm:$0xff] %vm584, %v692
        %701 = vst.msk [vmem:[%s246 + $0x10] sm:$0xff] %vm584, %v693
        %702 = vst.msk [vmem:[%s246 + $0x18] sm:$0xff] %vm584, %v694
        %703 = vst.msk [vmem:[%s246 + $0x20] sm:$0xff] %vm584, %v695
        %704 = vst.msk [vmem:[%s246 + $0x28] sm:$0xff] %vm584, %v696
        %705 = vst.msk [vmem:[%s246 + $0x30] sm:$0xff] %vm584, %v697
        %706 = vst.msk [vmem:[%s246 + $0x38] sm:$0xff] %vm584, %v698
      $region40: #{clip_loss.1} parent=31 // pred_fallthru
        _
      %s707 = smul.u32 8, %s21
      %p708 = scmp.lt.s32.totalorder %s707, 31
      %s709 = scalar_select %p708, %s707, 31
      %s710 = smul.addr %s709, 8
      %s711 = scalar_lea.vmem %s3, %s710
      %s712 = smul.u32 %s21, 2
      %s713 = sadd.s32 %s712, %s22
      %p714 = scmp.lt.s32.totalorder %s713, 7
      %s715 = scalar_select %p714, %s713, 7
      %s716 = scalar_lea.vmem %s4, %s715
      // Predicated region
      $region41: #{clip_loss.1} parent=31 // pred_check
        %p717 = pneg %p120
      $region42: #{clip_loss.1} parent=31 // pred_check_branch
        %719 = sbr.rel (%p717) target = $region44
      $region43: #{clip_loss.1} parent=31 // pred_region
        %s720 = smul.u32 8, %s21
      $region44: #{clip_loss.1} parent=31 // pred_fallthru
        _
      // Predicated region
      $region45: #{clip_loss.1} parent=31 // pred_check
        %p721 = pneg %p150
      $region46: #{clip_loss.1} parent=31 // pred_check_branch
        %723 = sbr.rel (%p721) target = $region48
      $region47: #{clip_loss.1} parent=31 // pred_region
        %s724 = smul.u32 %s21, 2
        %s725 = sadd.s32 %s724, %s22
      $region48: #{clip_loss.1} parent=31 // pred_fallthru
        _
    $region32: #{clip_loss.1} parent=5 // pred_fallthru
      _
    %p726 = scmp.le.s32.totalorder 2, %s12
    // Predicated region
    $region49: #{clip_loss.1} parent=5 // pred_check
      %p727 = pneg %p726
    $region50: #{clip_loss.1} parent=5 // pred_check_branch
      %729 = sbr.rel (%p727) target = $region52
    $region51: #{clip_loss.1} parent=5 // pred_region
      %s730 = ssub.s32 %s12, 2
      // Predicated region
      $region53: #{clip_loss.1} parent=51 // pred_check
        %p731 = pneg %p126
      $region54: #{clip_loss.1} parent=51 // pred_check_branch
        %733 = sbr.rel (%p731) target = $region56
      $region55: #{clip_loss.1} parent=51 // pred_region
        %s734 = smul.u32 8, %s23
        %p735 = scmp.lt.s32.totalorder %s734, 31
        %s736 = scalar_select %p735, %s734, 31
        %s737 = smul.addr %s736, 8
        %s738 = scalar_lea.vmem %s3, %s737
      $region56: #{clip_loss.1} parent=51 // pred_fallthru
        _
      // Predicated region
      $region57: #{clip_loss.1} parent=51 // pred_check
        %p739 = pneg %p156
      $region58: #{clip_loss.1} parent=51 // pred_check_branch
        %741 = sbr.rel (%p739) target = $region60
      $region59: #{clip_loss.1} parent=51 // pred_region
        %s742 = smul.u32 %s23, 2
        %s743 = sadd.s32 %s742, %s24
        %p744 = scmp.lt.s32.totalorder %s743, 7
        %s745 = scalar_select %p744, %s743, 7
        %s746 = scalar_lea.vmem %s4, %s745
      $region60: #{clip_loss.1} parent=51 // pred_fallthru
        _
    $region52: #{clip_loss.1} parent=5 // pred_fallthru
      _
  $region6: #{clip_loss.1} parent=0 // loop_footer
    %s16 = sadd.s32 1, %s12
  $region7: #{clip_loss.1} parent=0 // loop_footer_branch
    %11 = sbr.rel target = $region3
  $region8: #{clip_loss.1} parent=0 // loop_exit
    _

</llo_original>
